<compile_context>
chip_gen: v6e
topology: v6e:2x2x1
jax: 0.10.0
libtpu: 0.0.40
codegen_flags: <defaults>
</compile_context>

<pallas_src>
import functools

import jax
import jax.numpy as jnp
from jax.experimental import pallas as pl
from jax.experimental.pallas import tpu as pltpu

_LANE = 128


def _round_up(n, m):
    return ((n + m - 1) // m) * m


def _mlp_cluster_kernel(num_layers, *refs):
    # refs = (x_ref, w_0..w_{L-1}, b_0..b_{L-1}, out_ref); everything is a
    # whole-array VMEM-resident block (no grid).
    x_ref = refs[0]
    w_refs = refs[1:1 + num_layers]
    b_refs = refs[1 + num_layers:1 + 2 * num_layers]
    out_ref = refs[-1]

    h = x_ref[...]                                           # (B, F0)
    for l in range(num_layers):
        h = jnp.dot(h, w_refs[l][...],
                    preferred_element_type=jnp.float32) + b_refs[l][...]
        if l != num_layers - 1:
            h = jnp.maximum(h, 0.0)                          # ReLU between hidden layers
    # TODO(synk): nn.Dropout (train-time only) is not implemented; this matches
    # eval-mode semantics (dropout=None / identity).
    out_ref[...] = h.astype(out_ref.dtype)


def _pack_params(weights, biases):
    """Pack per-model parameters lane-dense.

    Layer 0 (input shared by all models): concat along F_out -> [F0, pad128(M*F1)].
    Layer l > 0: block-diagonal -> [pad128(M*F_in), pad128(M*F_out)].
    Biases: [1, pad128(M*F_out)].
    Zero padding up to 128-lane multiples keeps matmuls and stores lane-dense
    and is numerically inert (padded activations stay exactly zero).
    """
    num_layers = len(weights)
    M = weights[0].shape[0]
    packed_w, packed_b = [], []
    p_prev = None
    for l in range(num_layers):
        f_in, f_out = weights[l].shape[1], weights[l].shape[2]
        p_out = _round_up(M * f_out, _LANE)
        if l == 0:
            w = weights[0].transpose(1, 0, 2).reshape(f_in, M * f_out)
            w = jnp.pad(w, ((0, 0), (0, p_out - M * f_out)))
        else:
            w = jax.scipy.linalg.block_diag(*[weights[l][m] for m in range(M)])
            w = jnp.pad(w, ((0, p_prev - M * f_in), (0, p_out - M * f_out)))
        b = biases[l].reshape(1, M * f_out)
        b = jnp.pad(b, ((0, 0), (0, p_out - M * f_out)))
        packed_w.append(w)
        packed_b.append(b)
        p_prev = p_out
    return packed_w, packed_b


@jax.jit
def network_cluster_forward(x, weights, biases):
    """Apply every model's MLP to the same input.

    x:       [B, F0]
    weights: list of L arrays, each [M, F_in_l, F_out_l]
    biases:  list of L arrays, each [M, 1, F_out_l]
    returns: tuple of M arrays, each [B, F_out_last]  (like the PyTorch module's list)
    """
    num_layers = len(weights)
    M = weights[0].shape[0]
    B = x.shape[0]
    f_last = weights[-1].shape[-1]
    p_last = _round_up(M * f_last, _LANE)

    packed_w, packed_b = _pack_params(weights, biases)

    vmem = pl.BlockSpec(memory_space=pltpu.MemorySpace.VMEM)
    kernel = functools.partial(_mlp_cluster_kernel, num_layers)

    out_padded = pl.pallas_call(
        kernel,
        out_shape=jax.ShapeDtypeStruct((B, p_last), x.dtype),
        in_specs=[vmem] * (1 + 2 * num_layers),
        out_specs=vmem,
    )(x, *packed_w, *packed_b)

    # Split per model lazily (still under jit): [B, M*F_last] -> M x [B, F_last].
    out = out_padded[:, :M * f_last].reshape(B, M, f_last)
    return tuple(out[:, m, :] for m in range(M))


def init_cluster_params(key, shape, num_models, dtype=jnp.float32):
    """Deterministic init mimicking nn.Linear's uniform(-1/sqrt(fan_in), +) init."""
    layers_in = shape[:-1]
    layers_out = shape[1:]
    weights, biases = [], []
    for f_in, f_out in zip(layers_in, layers_out):
        key, kw, kb = jax.random.split(key, 3)
        bound = 1.0 / (f_in ** 0.5)
        w = jax.random.uniform(kw, (num_models, f_in, f_out), dtype,
                               minval=-bound, maxval=bound)
        b = jax.random.uniform(kb, (num_models, 1, f_out), dtype,
                               minval=-bound, maxval=bound)
        weights.append(w)
        biases.append(b)
    return weights, biases


def _reference_forward(x, weights, biases):
    """Pure-JAX reference matching the PyTorch forward."""
    num_layers = len(weights)
    num_models = weights[0].shape[0]
    outs = []
    for m in range(num_models):
        h = x
        for l in range(num_layers):
            h = h @ weights[l][m] + biases[l][m]
            if l != num_layers - 1:
                h = jnp.maximum(h, 0.0)
        outs.append(h)
    return outs


if __name__ == "__main__":
    # Module config: shape=(in, hidden, out) MLPs, num_models independent copies.
    shape = (16, 32, 8)       # -> Linear(16,32) + ReLU + Linear(32,8) per model
    num_models = 3
    batch = 8

    key = jax.random.PRNGKey(0)
    key, kx = jax.random.split(key)
    x = jax.random.normal(kx, (batch, shape[0]), jnp.float32)
    weights, biases = init_cluster_params(key, shape, num_models)

    outs = network_cluster_forward(x, weights, biases)
    outs = [jax.block_until_ready(o) for o in outs]

    refs = _reference_forward(x, weights, biases)
    for o, r in zip(outs, refs):
        assert o.shape == (batch, shape[-1])
        assert jnp.allclose(o, r, atol=1e-5, rtol=1e-5)

    print("KERNEL_OK")
</pallas_src>

<mosaic_0001>
module attributes {stable_mosaic.version = 11 : i64} {
  func.func @_mlp_cluster_kernel(%arg0: memref<8x16xf32, #tpu.memory_space<vmem>>, %arg1: memref<16x128xf32, #tpu.memory_space<vmem>>, %arg2: memref<128x128xf32, #tpu.memory_space<vmem>>, %arg3: memref<1x128xf32, #tpu.memory_space<vmem>>, %arg4: memref<1x128xf32, #tpu.memory_space<vmem>>, %arg5: memref<8x128xf32, #tpu.memory_space<vmem>>) attributes {dimension_semantics = [], scalar_prefetch = 0 : i64, scratch_operands = 0 : i64, tpu.core_type = #tpu.core_type<tc>} {
    %c0 = arith.constant 0 : index
    %c0_0 = arith.constant 0 : index
    %0 = vector.load %arg0[%c0, %c0_0] : memref<8x16xf32, #tpu.memory_space<vmem>>, vector<8x16xf32>
    %c0_1 = arith.constant 0 : index
    %c0_2 = arith.constant 0 : index
    %1 = vector.load %arg1[%c0_1, %c0_2] : memref<16x128xf32, #tpu.memory_space<vmem>>, vector<16x128xf32>
    %cst = arith.constant dense<0.000000e+00> : vector<8x128xf32>
    %2 = tpu.matmul %0, %1, %cst {dimension_numbers = #tpu.dot_dimension_numbers<[1], [0], [0], [1], [0, 0, 1, 1], [], []>} : vector<8x16xf32>, vector<16x128xf32>, vector<8x128xf32> -> vector<8x128xf32>
    %c0_3 = arith.constant 0 : index
    %c0_4 = arith.constant 0 : index
    %3 = vector.load %arg3[%c0_3, %c0_4] : memref<1x128xf32, #tpu.memory_space<vmem>>, vector<1x128xf32>
    %4 = vector.broadcast %3 : vector<1x128xf32> to vector<8x128xf32>
    %5 = arith.addf %2, %4 : vector<8x128xf32>
    %cst_5 = arith.constant 0.000000e+00 : f32
    %6 = vector.broadcast %cst_5 : f32 to vector<8x128xf32>
    %7 = arith.maximumf %5, %6 : vector<8x128xf32>
    %c0_6 = arith.constant 0 : index
    %c0_7 = arith.constant 0 : index
    %8 = vector.load %arg2[%c0_6, %c0_7] : memref<128x128xf32, #tpu.memory_space<vmem>>, vector<128x128xf32>
    %cst_8 = arith.constant dense<0.000000e+00> : vector<8x128xf32>
    %9 = tpu.matmul %7, %8, %cst_8 {dimension_numbers = #tpu.dot_dimension_numbers<[1], [0], [0], [1], [0, 0, 1, 1], [], []>} : vector<8x128xf32>, vector<128x128xf32>, vector<8x128xf32> -> vector<8x128xf32>
    %c0_9 = arith.constant 0 : index
    %c0_10 = arith.constant 0 : index
    %10 = vector.load %arg4[%c0_9, %c0_10] : memref<1x128xf32, #tpu.memory_space<vmem>>, vector<1x128xf32>
    %11 = vector.broadcast %10 : vector<1x128xf32> to vector<8x128xf32>
    %12 = arith.addf %9, %11 : vector<8x128xf32>
    %c0_11 = arith.constant 0 : index
    %c0_12 = arith.constant 0 : index
    %13 = vector.load %arg5[%c0_11, %c0_12] : memref<8x128xf32, #tpu.memory_space<vmem>>, vector<8x128xf32>
    tpu.vector_store %arg5[%c0_11, %c0_12], %12 {strides = array<i32>} : memref<8x128xf32, #tpu.memory_space<vmem>>, vector<8x128xf32>,
    return
  }
}

</mosaic_0001>

<llo_original>
// kernel: network_cluster_forward.1
$region0: #{network_cluster_forward.1}
  #allocation0 [shape = 'u32[]', space=smem, size = 0x4, offset = 0x4, fixed_abs, tag = 'smem constant byte address 0x4 - core index']
  #allocation1 [shape = 'u32[144,128]{1,0:T(1,128)}', space=vmem, size = 0x12000, scoped, tag = 'internal scratch']
  %s0 = inlined_call_operand.vmem [shape: f32[8,16], index: 0, kind: input, shape index: {}]
  %s1 = inlined_call_operand.vmem [shape: f32[16,128], index: 1, kind: input, shape index: {}]
  %s2 = inlined_call_operand.vmem [shape: f32[128,128], index: 2, kind: input, shape index: {}]
  %s3 = inlined_call_operand.vmem [shape: f32[1,128], index: 3, kind: input, shape index: {}]
  %s4 = inlined_call_operand.vmem [shape: f32[1,128], index: 4, kind: input, shape index: {}]
  %s5 = inlined_call_operand.vmem [shape: f32[8,128], index: 5, kind: output, shape index: {}]
  %s6 = sld [smem:[#allocation0]]
  $region30: #{network_cluster_forward.1} parent=0
    _
  %s8 = ssub.s32 1, %s6
  %s9 = scalar_select 0, %s8, %s6
  // Predicated region
  $region2: #{network_cluster_forward.1} parent=0 // pred_check
    _
  $region3: #{network_cluster_forward.1} parent=0 // pred_check_branch
    %11 = sbr.rel (0) target = $region5
  $region4: #{network_cluster_forward.1} parent=0 // pred_region
    _
  $region5: #{network_cluster_forward.1} parent=0 // pred_fallthru
    _
  // Predicated region
  $region6: #{network_cluster_forward.1} parent=0 // pred_check
    _
  $region7: #{network_cluster_forward.1} parent=0 // pred_check_branch
    %13 = sbr.rel (0) target = $region9
  $region8: #{network_cluster_forward.1} parent=0 // pred_region
    _
  $region9: #{network_cluster_forward.1} parent=0 // pred_fallthru
    _
  // Predicated region
  $region10: #{network_cluster_forward.1} parent=0 // pred_check
    _
  $region11: #{network_cluster_forward.1} parent=0 // pred_check_branch
    %15 = sbr.rel (0) target = $region13
  $region12: #{network_cluster_forward.1} parent=0 // pred_region
    _
  $region13: #{network_cluster_forward.1} parent=0 // pred_fallthru
    _
  // Predicated region
  $region14: #{network_cluster_forward.1} parent=0 // pred_check
    _
  $region15: #{network_cluster_forward.1} parent=0 // pred_check_branch
    %17 = sbr.rel (0) target = $region17
  $region16: #{network_cluster_forward.1} parent=0 // pred_region
    _
  $region17: #{network_cluster_forward.1} parent=0 // pred_fallthru
    _
  // Predicated region
  $region18: #{network_cluster_forward.1} parent=0 // pred_check
    _
  $region19: #{network_cluster_forward.1} parent=0 // pred_check_branch
    %19 = sbr.rel (0) target = $region21
  $region20: #{network_cluster_forward.1} parent=0 // pred_region
    _
  $region21: #{network_cluster_forward.1} parent=0 // pred_fallthru
    _
  %v20 = vld [vmem:[%s0] sm:$0xff]
  %v21 = vld [vmem:[%s1] sm:$0xff]
  %v22 = vld [vmem:[%s1 + $0x8] sm:$0xff]
  %v23 = vld [vmem:[%s3] sm:$0x1]
  %v25 = vlaneseq
  %v26 = vshrl.u32 %v25, 7
  %v27 = vsub.s32 0, %v26
  %v28 = vrot.slane %v23, %v27
  %vm30 = vcmask 130048
  %v32 = vsel %vm30, %v20, 0
  %34 = vmatprep.subr.mxu0 0.0
  %35 = vmatpush1.msra.mxu0 0.0
  %36 = vmatprep.subr.mxu0 0.0
  %37 = vmatpush1.msra.mxu0 0.0
  %38 = vmatprep.subr.mxu0 0.0
  %39 = vmatpush1.msra.mxu0 0.0
  %40 = vmatprep.subr.mxu0 0.0
  %41 = vmatpush1.msra.mxu0 0.0
  %42 = vmatprep.subr.mxu0 0.0
  %43 = vmatpush1.msra.mxu0 0.0
  %44 = vmatprep.subr.mxu0 0.0
  %45 = vmatpush1.msra.mxu0 0.0
  %46 = vmatprep.subr.mxu0 0.0
  %47 = vmatpush1.msra.mxu0 0.0
  %48 = vmatprep.subr.mxu0 0.0
  %49 = vmatpush1.msra.mxu0 0.0
  %50 = vmatprep.subr.mxu0 0.0
  %51 = vmatpush1.msra.mxu0 0.0
  %52 = vmatprep.subr.mxu0 0.0
  %53 = vmatpush1.msra.mxu0 0.0
  %54 = vmatprep.subr.mxu0 0.0
  %55 = vmatpush1.msra.mxu0 0.0
  %56 = vmatprep.subr.mxu0 0.0
  %57 = vmatpush1.msra.mxu0 0.0
  %58 = vmatprep.subr.mxu0 0.0
  %59 = vmatpush1.msra.mxu0 0.0
  %60 = vmatprep.subr.mxu0 0.0
  %61 = vmatpush1.msra.mxu0 0.0
  %62 = vmatprep.subr.mxu0 0.0
  %63 = vmatpush1.msra.mxu0 %v22
  %64 = vmatprep.subr.mxu0 0.0
  %65 = vmatpush1.msra.mxu0 %v21
  %66 = vmatprep.subr.mxu0 0.0
  %67 = vmatpush2.msra.mxu0 0.0
  %68 = vmatprep.subr.mxu0 0.0
  %69 = vmatpush2.msra.mxu0 0.0
  %70 = vmatprep.subr.mxu0 0.0
  %71 = vmatpush2.msra.mxu0 0.0
  %72 = vmatprep.subr.mxu0 0.0
  %73 = vmatpush2.msra.mxu0 0.0
  %74 = vmatprep.subr.mxu0 0.0
  %75 = vmatpush2.msra.mxu0 0.0
  %76 = vmatprep.subr.mxu0 0.0
  %77 = vmatpush2.msra.mxu0 0.0
  %78 = vmatprep.subr.mxu0 0.0
  %79 = vmatpush2.msra.mxu0 0.0
  %80 = vmatprep.subr.mxu0 0.0
  %81 = vmatpush2.msra.mxu0 0.0
  %82 = vmatprep.subr.mxu0 0.0
  %83 = vmatpush2.msra.mxu0 0.0
  %84 = vmatprep.subr.mxu0 0.0
  %85 = vmatpush2.msra.mxu0 0.0
  %86 = vmatprep.subr.mxu0 0.0
  %87 = vmatpush2.msra.mxu0 0.0
  %88 = vmatprep.subr.mxu0 0.0
  %89 = vmatpush2.msra.mxu0 0.0
  %90 = vmatprep.subr.mxu0 0.0
  %91 = vmatpush2.msra.mxu0 0.0
  %92 = vmatprep.subr.mxu0 0.0
  %93 = vmatpush2.msra.mxu0 0.0
  %94 = vmatprep.subr.mxu0 0.0
  %95 = vmatpush2.msra.mxu0 0.0
  %96 = vmatprep.subr.mxu0 0.0
  %97 = vmatpush2.msra.mxu0 0.0
  %98 = vmatprep.mubr.f32.mxu0 0.0
  %99 = vmatmul.mubr.f32.gmra.mxu0 %v32
  %v100 = vpop.f32.mrf.mxu0
  %v101 = vadd.f32 %v28, %v100
  %v102 = vpop.f32.mrf.mxu0
  %103 = vdwg.mxu0
  %v104 = vmax.f32 %v101, 0.0
  %v105 = vld [vmem:[%s2] sm:$0xff]
  %v106 = vld [vmem:[%s2 + $0x8] sm:$0xff]
  %v107 = vld [vmem:[%s2 + $0x10] sm:$0xff]
  %v108 = vld [vmem:[%s2 + $0x18] sm:$0xff]
  %v109 = vld [vmem:[%s2 + $0x20] sm:$0xff]
  %v110 = vld [vmem:[%s2 + $0x28] sm:$0xff]
  %v111 = vld [vmem:[%s2 + $0x30] sm:$0xff]
  %v112 = vld [vmem:[%s2 + $0x38] sm:$0xff]
  %v113 = vld [vmem:[%s2 + $0x40] sm:$0xff]
  %v114 = vld [vmem:[%s2 + $0x48] sm:$0xff]
  %v115 = vld [vmem:[%s2 + $0x50] sm:$0xff]
  %v116 = vld [vmem:[%s2 + $0x58] sm:$0xff]
  %v117 = vld [vmem:[%s2 + $0x60] sm:$0xff]
  %v118 = vld [vmem:[%s2 + $0x68] sm:$0xff]
  %v119 = vld [vmem:[%s2 + $0x70] sm:$0xff]
  %v120 = vld [vmem:[%s2 + $0x78] sm:$0xff]
  %v121 = vld [vmem:[%s4] sm:$0x1]
  %v123 = vlaneseq
  %v124 = vshrl.u32 %v123, 7
  %v125 = vsub.s32 0, %v124
  %v126 = vrot.slane %v121, %v125
  %128 = vmatprep.subr.mxu0 0.0
  %129 = vmatpush1.msra.mxu0 %v120
  %130 = vmatprep.subr.mxu0 0.0
  %131 = vmatpush1.msra.mxu0 %v119
  %132 = vmatprep.subr.mxu0 0.0
  %133 = vmatpush1.msra.mxu0 %v118
  %134 = vmatprep.subr.mxu0 0.0
  %135 = vmatpush1.msra.mxu0 %v117
  %136 = vmatprep.subr.mxu0 0.0
  %137 = vmatpush1.msra.mxu0 %v116
  %138 = vmatprep.subr.mxu0 0.0
  %139 = vmatpush1.msra.mxu0 %v115
  %140 = vmatprep.subr.mxu0 0.0
  %141 = vmatpush1.msra.mxu0 %v114
  %142 = vmatprep.subr.mxu0 0.0
  %143 = vmatpush1.msra.mxu0 %v113
  %144 = vmatprep.subr.mxu0 0.0
  %145 = vmatpush1.msra.mxu0 %v112
  %146 = vmatprep.subr.mxu0 0.0
  %147 = vmatpush1.msra.mxu0 %v111
  %148 = vmatprep.subr.mxu0 0.0
  %149 = vmatpush1.msra.mxu0 %v110
  %150 = vmatprep.subr.mxu0 0.0
  %151 = vmatpush1.msra.mxu0 %v109
  %152 = vmatprep.subr.mxu0 0.0
  %153 = vmatpush1.msra.mxu0 %v108
  %154 = vmatprep.subr.mxu0 0.0
  %155 = vmatpush1.msra.mxu0 %v107
  %156 = vmatprep.subr.mxu0 0.0
  %157 = vmatpush1.msra.mxu0 %v106
  %158 = vmatprep.subr.mxu0 0.0
  %159 = vmatpush1.msra.mxu0 %v105
  %160 = vmatprep.subr.mxu0 0.0
  %161 = vmatpush2.msra.mxu0 0.0
  %162 = vmatprep.subr.mxu0 0.0
  %163 = vmatpush2.msra.mxu0 0.0
  %164 = vmatprep.subr.mxu0 0.0
  %165 = vmatpush2.msra.mxu0 0.0
  %166 = vmatprep.subr.mxu0 0.0
  %167 = vmatpush2.msra.mxu0 0.0
  %168 = vmatprep.subr.mxu0 0.0
  %169 = vmatpush2.msra.mxu0 0.0
  %170 = vmatprep.subr.mxu0 0.0
  %171 = vmatpush2.msra.mxu0 0.0
  %172 = vmatprep.subr.mxu0 0.0
  %173 = vmatpush2.msra.mxu0 0.0
  %174 = vmatprep.subr.mxu0 0.0
  %175 = vmatpush2.msra.mxu0 0.0
  %176 = vmatprep.subr.mxu0 0.0
  %177 = vmatpush2.msra.mxu0 0.0
  %178 = vmatprep.subr.mxu0 0.0
  %179 = vmatpush2.msra.mxu0 0.0
  %180 = vmatprep.subr.mxu0 0.0
  %181 = vmatpush2.msra.mxu0 0.0
  %182 = vmatprep.subr.mxu0 0.0
  %183 = vmatpush2.msra.mxu0 0.0
  %184 = vmatprep.subr.mxu0 0.0
  %185 = vmatpush2.msra.mxu0 0.0
  %186 = vmatprep.subr.mxu0 0.0
  %187 = vmatpush2.msra.mxu0 0.0
  %188 = vmatprep.subr.mxu0 0.0
  %189 = vmatpush2.msra.mxu0 0.0
  %190 = vmatprep.subr.mxu0 0.0
  %191 = vmatpush2.msra.mxu0 0.0
  %192 = vmatprep.mubr.f32.mxu0 0.0
  %193 = vmatmul.mubr.f32.gmra.mxu0 %v104
  %v194 = vpop.f32.mrf.mxu0
  %v195 = vadd.f32 %v126, %v194
  %v196 = vpop.f32.mrf.mxu0
  %197 = vdwg.mxu0
  %198 = vst [vmem:[%s5] sm:$0xff] %v195
  // Predicated region
  $region22: #{network_cluster_forward.1} parent=0 // pred_check
    _
  $region23: #{network_cluster_forward.1} parent=0 // pred_check_branch
    %200 = sbr.rel (0) target = $region25
  $region24: #{network_cluster_forward.1} parent=0 // pred_region
    _
  $region25: #{network_cluster_forward.1} parent=0 // pred_fallthru
    _
  // Predicated region
  $region26: #{network_cluster_forward.1} parent=0 // pred_check
    _
  $region27: #{network_cluster_forward.1} parent=0 // pred_check_branch
    %202 = sbr.rel (0) target = $region29
  $region28: #{network_cluster_forward.1} parent=0 // pred_region
    _
  $region29: #{network_cluster_forward.1} parent=0 // pred_fallthru
    _

</llo_original>
